<compile_context>
chip_gen: v7x
topology: tpu7x:2x2x1
jax: 0.10.0
libtpu: 0.0.40
codegen_flags: <defaults>
</compile_context>

<pallas_src>
import functools

import jax
import jax.numpy as jnp
from jax import lax
from jax.experimental import pallas as pl
from jax.experimental.pallas import tpu as pltpu


def _style_loss_kernel(f_ref, tgt_ref, g_ref, loss_ref, *, scale, inv_n):
    """One grid step processes a (M, TK) chunk of the feature matrix.

    f_ref   : (M, TK)  chunk of features (VMEM)
    tgt_ref : (M, M)   target gram (already multiplied by weight)
    g_ref   : (M, M)   weighted gram output; doubles as the f32 accumulator
                       (resident across the K grid axis)
    loss_ref: (1, 1)   MSE loss output
    """
    k = pl.program_id(0)

    @pl.when(k == 0)
    def _():
        g_ref[...] = jnp.zeros_like(g_ref)

    f = f_ref[...]
    # Partial Gram: contract the spatial (last) axis of both operands on the
    # MXU with f32 accumulation -- no explicit f.T is materialized.
    g_ref[...] += lax.dot_general(
        f, f,
        dimension_numbers=(((1,), (1,)), ((), ())),
        preferred_element_type=jnp.float32,
    )

    @pl.when(k == pl.num_programs(0) - 1)
    def _():
        # G = (F @ F.T) / (a*b*c*d) * weight  -- scale applied once, at the end.
        g = g_ref[...] * scale
        g_ref[...] = g
        # MSELoss(G, target), mean reduction.  Small O(M^2) f32 epilogue.
        diff = g - tgt_ref[...]
        sq = diff * diff
        total = jnp.sum(sq, axis=1, keepdims=True)
        total = jnp.sum(total, axis=0, keepdims=True)
        loss_ref[...] = total * inv_n


def _pick_tile_k(M, K, budget_bytes=24 << 20):
    """Largest lane-aligned (multiple-of-128) K tile that divides K and whose
    double-buffered (M, tk) f32 chunk fits the given VMEM budget."""
    if K <= 128:
        return K
    cap = min(K, 4096, max(128, budget_bytes // (2 * M * 4)))
    t = (cap // 128) * 128
    while t >= 128:
        if K % t == 0:
            return t
        t -= 128
    # K has no multiple-of-128 divisor: fall back to one full-extent block.
    return K


def style_loss_forward(x, target_scaled, weight):
    """Returns (output, gram_weighted, loss).

    x             : (a, b, c, d) float32   -- NCHW input
    target_scaled : (a*b, a*b)   float32   -- target gram already * weight
    weight        : python float
    """
    a, b, c, d = x.shape
    M = a * b
    K = c * d

    features = x.reshape(M, K)
    scale = float(weight) / float(a * b * c * d)

    tk = _pick_tile_k(M, K)
    assert K % tk == 0
    num_k = K // tk

    kernel = functools.partial(
        _style_loss_kernel, scale=scale, inv_n=1.0 / float(M * M))

    # Rough VMEM requirement: double-buffered feature chunk + target + gram.
    vmem_need = 2 * M * tk * 4 + 4 * M * M * 4 + (1 << 16)
    vmem_limit = int(min(max(2 * vmem_need, 16 << 20), 56 << 20))

    gram, loss = pl.pallas_call(
        kernel,
        out_shape=(
            jax.ShapeDtypeStruct((M, M), jnp.float32),      # weighted gram
            jax.ShapeDtypeStruct((1, 1), jnp.float32),      # mse loss
        ),
        grid_spec=pltpu.PrefetchScalarGridSpec(
            num_scalar_prefetch=0,
            grid=(num_k,),
            in_specs=[
                pl.BlockSpec((M, tk), lambda k: (0, k)),    # feature chunk
                pl.BlockSpec((M, M), lambda k: (0, 0)),     # target gram
            ],
            out_specs=[
                pl.BlockSpec((M, M), lambda k: (0, 0)),     # gram (resident)
                pl.BlockSpec((1, 1), lambda k: (0, 0)),     # loss
            ],
        ),
        compiler_params=pltpu.CompilerParams(
            dimension_semantics=("arbitrary",),
            vmem_limit_bytes=vmem_limit,
        ),
    )(features, target_scaled)

    # output = input.clone(): JAX arrays are immutable, so the pass-through
    # output is simply `x` -- no extra HBM read/write inside the kernel.
    return x, gram, loss[0, 0]


def _reference(x, target_scaled, weight):
    a, b, c, d = x.shape
    f = x.reshape(a * b, c * d)
    g = (f @ f.T) / (a * b * c * d) * weight
    loss = jnp.mean((g - target_scaled) ** 2)
    return x, g, loss


if __name__ == "__main__":
    key = jax.random.PRNGKey(0)
    k1, k2 = jax.random.split(key)

    # Small shapes consistent with the module: NCHW.
    a, b, c, d = 2, 4, 16, 16
    weight = 1000.0

    x = jax.random.normal(k1, (a, b, c, d), dtype=jnp.float32)

    # Deterministic "target" gram (as from a style image), detached and
    # pre-multiplied by weight, as in StyleLoss.__init__.
    t_feat = jax.random.normal(k2, (a * b, c * d), dtype=jnp.float32)
    target_raw = (t_feat @ t_feat.T) / (a * b * c * d)
    target_scaled = target_raw * weight

    out, gram, loss = style_loss_forward(x, target_scaled, weight)
    jax.block_until_ready((out, gram, loss))

    ref_out, ref_gram, ref_loss = _reference(x, target_scaled, weight)

    assert out.shape == x.shape and out.dtype == x.dtype
    assert jnp.allclose(out, ref_out), "output pass-through mismatch"
    assert jnp.allclose(gram, ref_gram, rtol=1e-5, atol=1e-4), "gram mismatch"
    assert jnp.allclose(loss, ref_loss, rtol=1e-5, atol=1e-4), "loss mismatch"

    print("KERNEL_OK")
</pallas_src>

<mosaic_0001>
module attributes {stable_mosaic.version = 11 : i64} {
  func.func @_style_loss_kernel(%arg0: i32, %arg1: memref<8x256xf32, #tpu.memory_space<vmem>>, %arg2: memref<8x8xf32, #tpu.memory_space<vmem>>, %arg3: memref<8x8xf32, #tpu.memory_space<vmem>>, %arg4: memref<1x1xf32, #tpu.memory_space<vmem>>) attributes {dimension_semantics = [#tpu.dimension_semantics<arbitrary>], iteration_bounds = array<i64: 1>, scalar_prefetch = 0 : i64, scratch_operands = 0 : i64, tpu.core_type = #tpu.core_type<tc>, window_params = [{transform_indices = @transform_0, window_bounds = array<i64: 8, 256>}, {pipeline_mode = #tpu.pipeline_mode<synchronous>, transform_indices = @transform_1, window_bounds = array<i64: 8, 8>}, {pipeline_mode = #tpu.pipeline_mode<synchronous>, transform_indices = @transform_2, window_bounds = array<i64: 8, 8>}, {pipeline_mode = #tpu.pipeline_mode<synchronous>, transform_indices = @transform_3, window_bounds = array<i64: 1, 1>}]} {
    %c0_i32 = arith.constant 0 : i32
    %0 = arith.cmpi eq, %arg0, %c0_i32 : i32
    %1 = arith.extui %0 : i1 to i32
    %c0_i32_0 = arith.constant 0 : i32
    %2 = arith.cmpi ne, %1, %c0_i32_0 : i32
    scf.if %2 {
      %cst_8 = arith.constant 0.000000e+00 : f32
      %11 = vector.broadcast %cst_8 : f32 to vector<8x8xf32>
      %c0_9 = arith.constant 0 : index
      %c0_10 = arith.constant 0 : index
      %12 = vector.load %arg3[%c0_9, %c0_10] : memref<8x8xf32, #tpu.memory_space<vmem>>, vector<8x8xf32>
      tpu.vector_store %arg3[%c0_9, %c0_10], %11 {strides = array<i32>} : memref<8x8xf32, #tpu.memory_space<vmem>>, vector<8x8xf32>,
    } else {
    }
    %c0 = arith.constant 0 : index
    %c0_1 = arith.constant 0 : index
    %3 = vector.load %arg1[%c0, %c0_1] : memref<8x256xf32, #tpu.memory_space<vmem>>, vector<8x256xf32>
    %c0_2 = arith.constant 0 : index
    %c0_3 = arith.constant 0 : index
    %4 = vector.load %arg3[%c0_2, %c0_3] : memref<8x8xf32, #tpu.memory_space<vmem>>, vector<8x8xf32>
    %cst = arith.constant dense<0.000000e+00> : vector<8x8xf32>
    %5 = tpu.matmul %3, %3, %cst {dimension_numbers = #tpu.dot_dimension_numbers<[1], [1], [0], [0], [0, 0, 1, 0], [], []>} : vector<8x256xf32>, vector<8x256xf32>, vector<8x8xf32> -> vector<8x8xf32>
    %6 = arith.addf %4, %5 : vector<8x8xf32>
    %c0_4 = arith.constant 0 : index
    %c0_5 = arith.constant 0 : index
    %7 = vector.load %arg3[%c0_4, %c0_5] : memref<8x8xf32, #tpu.memory_space<vmem>>, vector<8x8xf32>
    tpu.vector_store %arg3[%c0_4, %c0_5], %6 {strides = array<i32>} : memref<8x8xf32, #tpu.memory_space<vmem>>, vector<8x8xf32>,
    %c0_i32_6 = arith.constant 0 : i32
    %8 = arith.cmpi eq, %arg0, %c0_i32_6 : i32
    %9 = arith.extui %8 : i1 to i32
    %c0_i32_7 = arith.constant 0 : i32
    %10 = arith.cmpi ne, %9, %c0_i32_7 : i32
    scf.if %10 {
      %c0_8 = arith.constant 0 : index
      %c0_9 = arith.constant 0 : index
      %11 = vector.load %arg3[%c0_8, %c0_9] : memref<8x8xf32, #tpu.memory_space<vmem>>, vector<8x8xf32>
      %cst_10 = arith.constant 0.48828125 : f32
      %12 = vector.broadcast %cst_10 : f32 to vector<8x8xf32>
      %13 = arith.mulf %11, %12 : vector<8x8xf32>
      %c0_11 = arith.constant 0 : index
      %c0_12 = arith.constant 0 : index
      %14 = vector.load %arg3[%c0_11, %c0_12] : memref<8x8xf32, #tpu.memory_space<vmem>>, vector<8x8xf32>
      tpu.vector_store %arg3[%c0_11, %c0_12], %13 {strides = array<i32>} : memref<8x8xf32, #tpu.memory_space<vmem>>, vector<8x8xf32>,
      %c0_13 = arith.constant 0 : index
      %c0_14 = arith.constant 0 : index
      %15 = vector.load %arg2[%c0_13, %c0_14] : memref<8x8xf32, #tpu.memory_space<vmem>>, vector<8x8xf32>
      %16 = arith.subf %13, %15 : vector<8x8xf32>
      %17 = arith.mulf %16, %16 : vector<8x8xf32>
      %cst_15 = arith.constant dense<0.000000e+00> : vector<8xf32>
      %18 = vector.multi_reduction <add>, %17, %cst_15 [1] : vector<8x8xf32> to vector<8xf32>
      %19 = vector.shape_cast %18 : vector<8xf32> to vector<8x1xf32>
      %cst_16 = arith.constant dense<0.000000e+00> : vector<1xf32>
      %20 = vector.multi_reduction <add>, %19, %cst_16 [0] : vector<8x1xf32> to vector<1xf32>
      %21 = vector.shape_cast %20 : vector<1xf32> to vector<1x1xf32>
      %cst_17 = arith.constant 1.562500e-02 : f32
      %22 = vector.broadcast %cst_17 : f32 to vector<1x1xf32>
      %23 = arith.mulf %21, %22 : vector<1x1xf32>
      %c0_18 = arith.constant 0 : index
      %c0_19 = arith.constant 0 : index
      %24 = vector.load %arg4[%c0_18, %c0_19] : memref<1x1xf32, #tpu.memory_space<vmem>>, vector<1x1xf32>
      tpu.vector_store %arg4[%c0_18, %c0_19], %23 {strides = array<i32>} : memref<1x1xf32, #tpu.memory_space<vmem>>, vector<1x1xf32>,
    } else {
    }
    return
  }
  func.func @transform_0(%arg0: i32) -> (i32, i32) {
    %c0_i32 = arith.constant 0 : i32
    %c0_i32_0 = arith.constant 0 : i32
    return %c0_i32, %arg0 : i32, i32
  }
  func.func @transform_1(%arg0: i32) -> (i32, i32) {
    %c0_i32 = arith.constant 0 : i32
    %c0_i32_0 = arith.constant 0 : i32
    %c0_i32_1 = arith.constant 0 : i32
    return %c0_i32, %c0_i32_0 : i32, i32
  }
  func.func @transform_2(%arg0: i32) -> (i32, i32) {
    %c0_i32 = arith.constant 0 : i32
    %c0_i32_0 = arith.constant 0 : i32
    %c0_i32_1 = arith.constant 0 : i32
    return %c0_i32, %c0_i32_0 : i32, i32
  }
  func.func @transform_3(%arg0: i32) -> (i32, i32) {
    %c0_i32 = arith.constant 0 : i32
    %c0_i32_0 = arith.constant 0 : i32
    %c0_i32_1 = arith.constant 0 : i32
    return %c0_i32, %c0_i32_0 : i32, i32
  }
}

</mosaic_0001>

<llo_original>
// kernel: tpu_custom_call.1
$region0: #{tpu_custom_call.1}
  #allocation0 [shape = 'u32[]', space=smem, size = 0x4, offset = 0x4, fixed_abs, tag = 'smem constant byte address 0x4 - core index']
  #allocation1 [shape = 'u32[144,128]{1,0:T(1,128)}', space=vmem, size = 0x12000, scoped, tag = 'internal scratch']
  %s0 = inlined_call_operand.hbm [shape: f32[8,256], index: 0, kind: input, shape index: {}]
  %s1 = inlined_call_operand.hbm [shape: f32[8,8], index: 1, kind: input, shape index: {}]
  %s2 = inlined_call_operand.hbm [shape: f32[8,8], index: 2, kind: output, shape index: {0}]
  %s3 = inlined_call_operand.hbm [shape: f32[1,1], index: 3, kind: output, shape index: {1}]
  %4 = xla_tuple %s2, %s3
  %s5 = sld [smem:[#allocation0]]
  $region42: #{tpu_custom_call.1} parent=0
    _
  %s7 = ssub.s32 1, %s5
  %s8 = scalar_select 0, %s7, %s5
  $region1: #{tpu_custom_call.1} parent=0
    #allocation2 [shape = 'u8[8192]{0}', space=vmem, size = 0x2000, scoped, tag = 'input window, operand 0, single buffered']
    #allocation3 [shape = 's32[1]{0}', space=sflag, size = 0x4, scoped, tag = 'scoped memory for tpu_custom_call.1']
    #allocation4 [shape = 's32[1]{0}', space=sflag, size = 0x4, scoped, tag = 'scoped memory for tpu_custom_call.1']
    #allocation5 [shape = 'u8[4096]{0}', space=vmem, size = 0x1000, scoped, tag = 'input window, operand 1, single buffered']
    #allocation6 [shape = 's32[1]{0}', space=sflag, size = 0x4, scoped, tag = 'scoped memory for tpu_custom_call.1']
    #allocation7 [shape = 'u8[4096]{0}', space=vmem, size = 0x1000, scoped, tag = 'output window, operand 0, single buffered']
    #allocation8 [shape = 'u8[512]{0}', space=vmem, size = 0x400, scoped, tag = 'output window, operand 1, single buffered']
    #allocation9 [shape = 's32[1]{0}', space=sflag, size = 0x4, scoped, tag = 'scoped memory for tpu_custom_call.1']
    %9 = vsyncpa [#allocation3], 0
    %10 = vsyncpa [#allocation6], 0
    %11 = vsyncpa [#allocation4], 0
    %12 = vsyncpa [#allocation9], 0
    // Predicated region
    $region2: #{tpu_custom_call.1} parent=1 // pred_check
      _
    $region3: #{tpu_custom_call.1} parent=1 // pred_check_branch
      %14 = sbr.rel (0) target = $region5
    $region4: #{tpu_custom_call.1} parent=1 // pred_region
      %s16 = ssub.s32 256, 256
      %17 = vsyncadd [#allocation3], %s16
      %s19 = sshll.u32 [#allocation2], 4
      %s20 = int_to_ptr.vmem [resolvable:$true] %s19
      %22 = dma.hbm_to_vmem [thread:$0]  %s0, 256, %s20, [#allocation3]
    $region5: #{tpu_custom_call.1} parent=1 // pred_fallthru
      _
    // Predicated region
    $region6: #{tpu_custom_call.1} parent=1 // pred_check
      _
    $region7: #{tpu_custom_call.1} parent=1 // pred_check_branch
      %24 = sbr.rel (0) target = $region9
    $region8: #{tpu_custom_call.1} parent=1 // pred_region
      %s26 = ssub.s32 128, 128
      %27 = vsyncadd [#allocation6], %s26
      %s29 = sshll.u32 [#allocation5], 4
      %s30 = int_to_ptr.vmem [resolvable:$true] %s29
      %32 = dma.hbm_to_vmem [thread:$0]  %s1, 128, %s30, [#allocation6]
    $region9: #{tpu_custom_call.1} parent=1 // pred_fallthru
      _
    // Predicated region
    $region10: #{tpu_custom_call.1} parent=1 // pred_check
      _
    $region11: #{tpu_custom_call.1} parent=1 // pred_check_branch
      %34 = sbr.rel (0) target = $region13
    $region12: #{tpu_custom_call.1} parent=1 // pred_region
      %35 = dma.done [#allocation3], 256
    $region13: #{tpu_custom_call.1} parent=1 // pred_fallthru
      _
    // Predicated region
    $region14: #{tpu_custom_call.1} parent=1 // pred_check
      _
    $region15: #{tpu_custom_call.1} parent=1 // pred_check_branch
      %37 = sbr.rel (0) target = $region17
    $region16: #{tpu_custom_call.1} parent=1 // pred_region
      %38 = dma.done [#allocation6], 128
    $region17: #{tpu_custom_call.1} parent=1 // pred_fallthru
      _
    %p39 = scmp.eq.s32.totalorder 0, 0
    // Predicated region
    $region18: #{tpu_custom_call.1} parent=1 // pred_check
      %p40 = pneg %p39
    $region19: #{tpu_custom_call.1} parent=1 // pred_check_branch
      %42 = sbr.rel (%p40) target = $region21
    $region20: #{tpu_custom_call.1} parent=1 // pred_region
      %vm43 = vcmask 64512
      %44 = vst.msk [vmem:[#allocation7] sm:$0xff] %vm43, 0.0
    $region21: #{tpu_custom_call.1} parent=1 // pred_fallthru
      _
    %v45 = vld [vmem:[#allocation2] sm:$0xff]
    %v46 = vld [vmem:[#allocation2 + $0x8] sm:$0xff]
    %v47 = vld [vmem:[#allocation7] sm:$0xff]
    %48 = vmatprep.subr.mxu0 %v46
    %49 = vmatpush1.xpose.msra.mxu0 %v45
    %50 = vmatprep.subr.mxu0 0.0
    %51 = vmatpush1.xpose.msra.mxu0 0.0
    %52 = vmatprep.subr.mxu0 0.0
    %53 = vmatpush1.xpose.msra.mxu0 0.0
    %54 = vmatprep.subr.mxu0 0.0
    %55 = vmatpush1.xpose.msra.mxu0 0.0
    %56 = vmatprep.subr.mxu0 0.0
    %57 = vmatpush1.xpose.msra.mxu0 0.0
    %58 = vmatprep.subr.mxu0 0.0
    %59 = vmatpush1.xpose.msra.mxu0 0.0
    %60 = vmatprep.subr.mxu0 0.0
    %61 = vmatpush1.xpose.msra.mxu0 0.0
    %62 = vmatprep.subr.mxu0 0.0
    %63 = vmatpush1.xpose.msra.mxu0 0.0
    %64 = vmatprep.subr.mxu0 0.0
    %65 = vmatpush1.xpose.msra.mxu0 0.0
    %66 = vmatprep.subr.mxu0 0.0
    %67 = vmatpush1.xpose.msra.mxu0 0.0
    %68 = vmatprep.subr.mxu0 0.0
    %69 = vmatpush1.xpose.msra.mxu0 0.0
    %70 = vmatprep.subr.mxu0 0.0
    %71 = vmatpush1.xpose.msra.mxu0 0.0
    %72 = vmatprep.subr.mxu0 0.0
    %73 = vmatpush1.xpose.msra.mxu0 0.0
    %74 = vmatprep.subr.mxu0 0.0
    %75 = vmatpush1.xpose.msra.mxu0 0.0
    %76 = vmatprep.subr.mxu0 0.0
    %77 = vmatpush1.xpose.msra.mxu0 0.0
    %78 = vmatprep.subr.mxu0 0.0
    %79 = vmatpush1.xpose.msra.mxu0 0.0
    %80 = vmatprep.subr.mxu0 0.0
    %81 = vmatpush1.xpose.msra.mxu0 0.0
    %82 = vmatprep.subr.mxu0 0.0
    %83 = vmatpush1.xpose.msra.mxu0 0.0
    %84 = vmatprep.subr.mxu0 0.0
    %85 = vmatpush1.xpose.msra.mxu0 0.0
    %86 = vmatprep.subr.mxu0 0.0
    %87 = vmatpush1.xpose.msra.mxu0 0.0
    %88 = vmatprep.subr.mxu0 0.0
    %89 = vmatpush1.xpose.msra.mxu0 0.0
    %90 = vmatprep.subr.mxu0 0.0
    %91 = vmatpush1.xpose.msra.mxu0 0.0
    %92 = vmatprep.subr.mxu0 0.0
    %93 = vmatpush1.xpose.msra.mxu0 0.0
    %94 = vmatprep.subr.mxu0 0.0
    %95 = vmatpush1.xpose.msra.mxu0 0.0
    %96 = vmatprep.subr.mxu0 0.0
    %97 = vmatpush1.xpose.msra.mxu0 0.0
    %98 = vmatprep.subr.mxu0 0.0
    %99 = vmatpush1.xpose.msra.mxu0 0.0
    %100 = vmatprep.subr.mxu0 0.0
    %101 = vmatpush1.xpose.msra.mxu0 0.0
    %102 = vmatprep.subr.mxu0 0.0
    %103 = vmatpush1.xpose.msra.mxu0 0.0
    %104 = vmatprep.subr.mxu0 0.0
    %105 = vmatpush1.xpose.msra.mxu0 0.0
    %106 = vmatprep.subr.mxu0 0.0
    %107 = vmatpush1.xpose.msra.mxu0 0.0
    %108 = vmatprep.subr.mxu0 0.0
    %109 = vmatpush1.xpose.msra.mxu0 0.0
    %110 = vmatprep.subr.mxu0 0.0
    %111 = vmatpush1.xpose.msra.mxu0 0.0
    %112 = vmatprep.mubr.f32.mxu0 %v46
    %113 = vmatmul.mubr.f32.gmra.mrb[0].mxu0 %v45
    %v114 = vpop.f32.mrb[0].mxu0
    %v115 = vadd.f32 0.0, %v114
    %v116 = vpop.f32.mrb[0].mxu0
    %117 = vdwg.mxu0
    %v118 = vadd.f32 %v47, %v115
    %vm119 = vcmask 64512
    %120 = vst.msk [vmem:[#allocation7] sm:$0xff] %vm119, %v118
    // Predicated region
    $region22: #{tpu_custom_call.1} parent=1 // pred_check
      %p121 = pneg %p39
    $region23: #{tpu_custom_call.1} parent=1 // pred_check_branch
      %123 = sbr.rel (%p121) target = $region25
    $region24: #{tpu_custom_call.1} parent=1 // pred_region
      %v124 = vld [vmem:[#allocation7] sm:$0xff]
      %v125 = vmul.f32 %v124, 0.48828125
      %126 = vst.msk [vmem:[#allocation7] sm:$0xff] %vm119, %v125
      %v127 = vld [vmem:[#allocation5] sm:$0xff]
      %v128 = vsub.f32 %v125, %v127
      %v129 = vmul.f32 %v128, %v128
      %v130 = vsel %vm119, %v129, 0.0
      %131 = vadd.xlane.f32.xlu0 %v130
      %v132 = vpop.xlane.xlu0 %131
      %v133 = vrot.slane %v132, 4
      %v134 = vadd.f32 %v132, %v133
      %v135 = vrot.slane %v134, 2
      %v136 = vadd.f32 %v134, %v135
      %v137 = vrot.slane %v136, 1
      %v138 = vadd.f32 %v136, %v137
      %v139 = vmul.f32 %v138, 0.015625
      %vm140 = vcmask 0
      %141 = vst.msk [vmem:[#allocation8] sm:$0x1] %vm140, %v139
    $region25: #{tpu_custom_call.1} parent=1 // pred_fallthru
      _
    // Predicated region
    $region26: #{tpu_custom_call.1} parent=1 // pred_check
      _
    $region27: #{tpu_custom_call.1} parent=1 // pred_check_branch
      %143 = sbr.rel (0) target = $region29
    $region28: #{tpu_custom_call.1} parent=1 // pred_region
      %s145 = ssub.s32 128, 128
      %146 = vsyncadd [#allocation4], %s145
      %s148 = sshll.u32 [#allocation7], 4
      %s149 = int_to_ptr.vmem [resolvable:$true] %s148
      %151 = dma.vmem_to_hbm [thread:$0]  %s149, 128, %s2, [#allocation4]
    $region29: #{tpu_custom_call.1} parent=1 // pred_fallthru
      _
    // Predicated region
    $region30: #{tpu_custom_call.1} parent=1 // pred_check
      _
    $region31: #{tpu_custom_call.1} parent=1 // pred_check_branch
      %153 = sbr.rel (0) target = $region33
    $region32: #{tpu_custom_call.1} parent=1 // pred_region
      %s155 = ssub.s32 16, 16
      %156 = vsyncadd [#allocation9], %s155
      %s158 = sshll.u32 [#allocation8], 4
      %s159 = int_to_ptr.vmem [resolvable:$true] %s158
      %161 = dma.vmem_to_hbm [thread:$0]  %s159, 16, %s3, [#allocation9]
    $region33: #{tpu_custom_call.1} parent=1 // pred_fallthru
      _
    // Predicated region
    $region34: #{tpu_custom_call.1} parent=1 // pred_check
      _
    $region35: #{tpu_custom_call.1} parent=1 // pred_check_branch
      %163 = sbr.rel (0) target = $region37
    $region36: #{tpu_custom_call.1} parent=1 // pred_region
      %164 = dma.done [#allocation4], 128
    $region37: #{tpu_custom_call.1} parent=1 // pred_fallthru
      _
    // Predicated region
    $region38: #{tpu_custom_call.1} parent=1 // pred_check
      _
    $region39: #{tpu_custom_call.1} parent=1 // pred_check_branch
      %166 = sbr.rel (0) target = $region41
    $region40: #{tpu_custom_call.1} parent=1 // pred_region
      %167 = dma.done [#allocation9], 16
    $region41: #{tpu_custom_call.1} parent=1 // pred_fallthru
      _
    %168 = vsyncpa [#allocation3], 1
    %169 = vsyncpa [#allocation6], 1
    %170 = vsyncpa [#allocation4], 1
    %171 = vsyncpa [#allocation9], 1

</llo_original>
